<compile_context>
chip_gen: v7x
topology: tpu7x:2x2x1
jax: 0.10.0
libtpu: 0.0.40
codegen_flags: <defaults>
</compile_context>

<pallas_src>
import jax
import jax.numpy as jnp
from jax.experimental import pallas as pl
from jax.experimental.pallas import tpu as pltpu


def _round_up(x, m):
    return ((x + m - 1) // m) * m


def _patch_embed_kernel(x_ref, w_ref, b_ref, o_ref):
    # x_ref: (tm, patch_dim) bf16 patch rows
    # w_ref: (patch_dim, tn) bf16 weight (pre-transposed once in the wrapper)
    # b_ref: (1, tn) f32 bias
    # o_ref: (tm, tn) output tile
    acc = jnp.dot(x_ref[...], w_ref[...], preferred_element_type=jnp.float32)
    o_ref[...] = (acc + b_ref[...]).astype(o_ref.dtype)


# Double-buffered VMEM budget that fits v5e's 16 MiB scoped-VMEM default.
_VMEM_BUDGET = 13 * 1024 * 1024


def _vmem_footprint(tm, tn, patch_dim, out_bytes):
    x_tile = tm * patch_dim * 2          # bf16
    w_tile = patch_dim * tn * 2          # bf16
    b_tile = tn * 4                      # f32
    o_tile = tm * tn * out_bytes
    return 2 * (x_tile + w_tile + b_tile + o_tile)   # x2 for double-buffering


def patch_embed(x, weight, bias, patch_size, out_dtype=None):
    """x: (B, C, H, W); weight: (E, C, p, p); bias: (E,). Returns (B, num_patches, E)."""
    B, C, H, W = x.shape
    E = weight.shape[0]
    p = patch_size
    nh, nw = H // p, W // p
    num_patches = nh * nw
    rows = B * num_patches
    patch_dim = C * p * p
    if out_dtype is None:
        out_dtype = x.dtype
    out_bytes = jnp.dtype(out_dtype).itemsize

    # --- glue (XLA): cast first (half the bytes through the transpose pass), then
    # extract non-overlapping patches flattened in (C, kh, kw) order to match
    # PyTorch's conv-weight flatten order.
    xb = x.astype(jnp.bfloat16)
    xp = xb.reshape(B, C, nh, p, nw, p)
    xp = jnp.transpose(xp, (0, 2, 4, 1, 3, 5)).reshape(rows, patch_dim)

    # Weight: one-time tiny transpose to MXU-native (K, N) layout; bias as (1, E) f32.
    w = weight.reshape(E, patch_dim).T.astype(jnp.bfloat16)      # (patch_dim, E)
    b = bias.reshape(1, E).astype(jnp.float32)

    # --- embed-dim tiling: single lane-dense column tile whenever the
    # double-buffered bf16 weight tile fits ~4 MB of VMEM; else fall back.
    E_pad = _round_up(E, 128)
    if 2 * (E_pad * patch_dim * 2) <= 4 * 1024 * 1024:
        tn = E_pad
    elif E_pad % 512 == 0:
        tn = 512
    elif E_pad % 256 == 0:
        tn = 256
    else:
        tn = 128
    if E_pad != E:
        # Weight/bias padding is a one-time cost over tiny arrays; it buys
        # lane-dense output stores. Skipped entirely when E is already 128-aligned.
        w = jnp.pad(w, ((0, 0), (0, E_pad - E)))
        b = jnp.pad(b, ((0, 0), (0, E_pad - E)))

    # --- row tiling: big tiles amortize the ~0.35 us/grid-step pipeline overhead
    # (this op is memory-bound). Multiple of 16 for bf16 sublane packing.
    tm = min(1024, _round_up(rows, 16))
    while tm > 64 and _vmem_footprint(tm, tn, patch_dim, out_bytes) > _VMEM_BUDGET:
        tm //= 2
    footprint = _vmem_footprint(tm, tn, patch_dim, out_bytes)
    vmem_limit = None
    if footprint > _VMEM_BUDGET:
        # Only for extreme shapes: ask for more scoped VMEM (with headroom).
        vmem_limit = int(footprint + (2 << 20))

    # No row padding: Pallas masks the ragged last row tile (if any).
    grid = (pl.cdiv(rows, tm), E_pad // tn)

    cp_kwargs = dict(dimension_semantics=("parallel", "parallel"))
    if vmem_limit is not None:
        cp_kwargs["vmem_limit_bytes"] = vmem_limit

    out = pl.pallas_call(
        _patch_embed_kernel,
        out_shape=jax.ShapeDtypeStruct((rows, E_pad), out_dtype),
        grid_spec=pltpu.PrefetchScalarGridSpec(
            num_scalar_prefetch=0,
            grid=grid,
            in_specs=[
                # activations: new row tile per i, constant across embed tiles
                pl.BlockSpec((tm, patch_dim), lambda i, j: (i, 0)),
                # weight: constant along the row-grid axis -> VMEM-resident
                pl.BlockSpec((patch_dim, tn), lambda i, j: (0, j)),
                # bias tile
                pl.BlockSpec((1, tn), lambda i, j: (0, j)),
            ],
            out_specs=pl.BlockSpec((tm, tn), lambda i, j: (i, j)),
        ),
        compiler_params=pltpu.CompilerParams(**cp_kwargs),
    )(xp, w, b)

    if E_pad != E:
        out = out[:, :E]
    return out.reshape(B, num_patches, E)


if __name__ == "__main__":
    # Module config consistent with the forward: img_size=16, patch_size=4,
    # in_channels=4, embed_dim=32 -> num_patches = (16//4)**2 = 16.
    img_size, patch_size, in_channels, embed_dim = 16, 4, 4, 32
    B = 2

    key = jax.random.PRNGKey(0)
    kx, kw, kb = jax.random.split(key, 3)

    x = jax.random.normal(kx, (B, in_channels, img_size, img_size), dtype=jnp.float32)
    weight = 0.02 * jax.random.normal(
        kw, (embed_dim, in_channels, patch_size, patch_size), dtype=jnp.float32)
    bias = 0.01 * jax.random.normal(kb, (embed_dim,), dtype=jnp.float32)

    out = patch_embed(x, weight, bias, patch_size=patch_size)
    out = jax.block_until_ready(out)

    # Pure-JAX f32 reference (stride==kernel conv == per-patch linear projection).
    ref = jax.lax.conv_general_dilated(
        x, weight, window_strides=(patch_size, patch_size), padding="VALID",
        dimension_numbers=("NCHW", "OIHW", "NCHW"))
    ref = ref + bias[None, :, None, None]
    ref = ref.reshape(B, embed_dim, -1).transpose(0, 2, 1)   # flatten(2).transpose(1,2)

    assert out.shape == (B, (img_size // patch_size) ** 2, embed_dim)
    # bf16 matmul operands with f32 accumulation -> loosened tolerance.
    assert jnp.allclose(out, ref, atol=2e-2, rtol=2e-2), (
        float(jnp.max(jnp.abs(out - ref))))
    print("KERNEL_OK")
</pallas_src>

<mosaic_0001>
module attributes {stable_mosaic.version = 11 : i64} {
  func.func @_patch_embed_kernel(%arg0: i32, %arg1: i32, %arg2: memref<32x64xbf16, #tpu.memory_space<vmem>>, %arg3: memref<64x128xbf16, #tpu.memory_space<vmem>>, %arg4: memref<1x128xf32, #tpu.memory_space<vmem>>, %arg5: memref<32x128xf32, #tpu.memory_space<vmem>>) attributes {dimension_semantics = [#tpu.dimension_semantics<parallel>, #tpu.dimension_semantics<parallel>], iteration_bounds = array<i64: 1, 1>, scalar_prefetch = 0 : i64, scratch_operands = 0 : i64, tpu.core_type = #tpu.core_type<tc>, window_params = [{transform_indices = @transform_0, window_bounds = array<i64: 32, 64>}, {transform_indices = @transform_1, window_bounds = array<i64: 64, 128>}, {transform_indices = @transform_2, window_bounds = array<i64: 1, 128>}, {transform_indices = @transform_3, window_bounds = array<i64: 32, 128>}]} {
    %c0 = arith.constant 0 : index
    %c0_0 = arith.constant 0 : index
    %0 = vector.load %arg2[%c0, %c0_0] : memref<32x64xbf16, #tpu.memory_space<vmem>>, vector<32x64xbf16>
    %c0_1 = arith.constant 0 : index
    %c0_2 = arith.constant 0 : index
    %1 = vector.load %arg3[%c0_1, %c0_2] : memref<64x128xbf16, #tpu.memory_space<vmem>>, vector<64x128xbf16>
    %cst = arith.constant dense<0.000000e+00> : vector<32x128xf32>
    %2 = tpu.matmul %0, %1, %cst {dimension_numbers = #tpu.dot_dimension_numbers<[1], [0], [0], [1], [0, 0, 1, 1], [], []>} : vector<32x64xbf16>, vector<64x128xbf16>, vector<32x128xf32> -> vector<32x128xf32>
    %c0_3 = arith.constant 0 : index
    %c0_4 = arith.constant 0 : index
    %3 = vector.load %arg4[%c0_3, %c0_4] : memref<1x128xf32, #tpu.memory_space<vmem>>, vector<1x128xf32>
    %4 = vector.broadcast %3 : vector<1x128xf32> to vector<32x128xf32>
    %5 = arith.addf %2, %4 : vector<32x128xf32>
    %c0_5 = arith.constant 0 : index
    %c0_6 = arith.constant 0 : index
    %6 = vector.load %arg5[%c0_5, %c0_6] : memref<32x128xf32, #tpu.memory_space<vmem>>, vector<32x128xf32>
    tpu.vector_store %arg5[%c0_5, %c0_6], %5 {strides = array<i32>} : memref<32x128xf32, #tpu.memory_space<vmem>>, vector<32x128xf32>,
    return
  }
  func.func @transform_0(%arg0: i32, %arg1: i32) -> (i32, i32) {
    %c0_i32 = arith.constant 0 : i32
    %c0_i32_0 = arith.constant 0 : i32
    return %arg0, %c0_i32 : i32, i32
  }
  func.func @transform_1(%arg0: i32, %arg1: i32) -> (i32, i32) {
    %c0_i32 = arith.constant 0 : i32
    %c0_i32_0 = arith.constant 0 : i32
    return %c0_i32, %arg1 : i32, i32
  }
  func.func @transform_2(%arg0: i32, %arg1: i32) -> (i32, i32) {
    %c0_i32 = arith.constant 0 : i32
    %c0_i32_0 = arith.constant 0 : i32
    return %c0_i32, %arg1 : i32, i32
  }
  func.func @transform_3(%arg0: i32, %arg1: i32) -> (i32, i32) {
    %c0_i32 = arith.constant 0 : i32
    return %arg0, %arg1 : i32, i32
  }
}

</mosaic_0001>

<llo_original>
// kernel: tpu_custom_call.1
$region0: #{tpu_custom_call.1}
  #allocation0 [shape = 'u32[]', space=smem, size = 0x4, offset = 0x4, fixed_abs, tag = 'smem constant byte address 0x4 - core index']
  #allocation1 [shape = 'u32[144,128]{1,0:T(1,128)}', space=vmem, size = 0x12000, scoped, tag = 'internal scratch']
  %s0 = inlined_call_operand.hbm [shape: bf16[32,64], index: 0, kind: input, shape index: {}]
  %s1 = inlined_call_operand.hbm [shape: bf16[64,128], index: 1, kind: input, shape index: {}]
  %s2 = inlined_call_operand.vmem [shape: f32[1,128], index: 2, kind: input, shape index: {}]
  %s3 = inlined_call_operand.hbm [shape: f32[32,128], index: 3, kind: output, shape index: {}]
  %s4 = sld [smem:[#allocation0]]
  $region30: #{tpu_custom_call.1} parent=0
    _
  %s6 = ssub.s32 1, %s4
  %s7 = scalar_select 0, %s6, %s4
  $region1: #{tpu_custom_call.1} parent=0
    #allocation2 [shape = 'u8[8192]{0}', space=vmem, size = 0x2000, scoped, tag = 'input window, operand 0, single buffered']
    #allocation3 [shape = 's32[1]{0}', space=sflag, size = 0x4, scoped, tag = 'scoped memory for tpu_custom_call.1']
    #allocation4 [shape = 's32[1]{0}', space=sflag, size = 0x4, scoped, tag = 'scoped memory for tpu_custom_call.1']
    #allocation5 [shape = 'u8[16384]{0}', space=vmem, size = 0x4000, scoped, tag = 'input window, operand 1, single buffered']
    #allocation6 [shape = 's32[1]{0}', space=sflag, size = 0x4, scoped, tag = 'scoped memory for tpu_custom_call.1']
    #allocation7 [shape = 'u8[16384]{0}', space=vmem, size = 0x4000, scoped, tag = 'output window, operand 0, single buffered']
    %8 = vsyncpa [#allocation3], 0
    %9 = vsyncpa [#allocation6], 0
    %10 = vsyncpa [#allocation4], 0
    // Predicated region
    $region2: #{tpu_custom_call.1} parent=1 // pred_check
      _
    $region3: #{tpu_custom_call.1} parent=1 // pred_check_branch
      %12 = sbr.rel (0) target = $region5
    $region4: #{tpu_custom_call.1} parent=1 // pred_region
      %s14 = ssub.s32 256, 256
      %15 = vsyncadd [#allocation3], %s14
      %s16 = sshll.u32 [#allocation2], 4
      %s17 = int_to_ptr.vmem [resolvable:$true] %s16
      %22 = dma.hbm_to_vmem [thread:$0]  %s0, 256, %s17, [#allocation3], 64, 64, 4
    $region5: #{tpu_custom_call.1} parent=1 // pred_fallthru
      _
    // Predicated region
    $region6: #{tpu_custom_call.1} parent=1 // pred_check
      _
    $region7: #{tpu_custom_call.1} parent=1 // pred_check_branch
      %24 = sbr.rel (0) target = $region9
    $region8: #{tpu_custom_call.1} parent=1 // pred_region
      %s26 = ssub.s32 512, 512
      %27 = vsyncadd [#allocation6], %s26
      %s28 = sshll.u32 [#allocation5], 4
      %s29 = int_to_ptr.vmem [resolvable:$true] %s28
      %34 = dma.hbm_to_vmem [thread:$0]  %s1, 512, %s29, [#allocation6], 64, 64, 4
    $region9: #{tpu_custom_call.1} parent=1 // pred_fallthru
      _
    // Predicated region
    $region10: #{tpu_custom_call.1} parent=1 // pred_check
      _
    $region11: #{tpu_custom_call.1} parent=1 // pred_check_branch
      %36 = sbr.rel (0) target = $region13
    $region12: #{tpu_custom_call.1} parent=1 // pred_region
      _
    $region13: #{tpu_custom_call.1} parent=1 // pred_fallthru
      _
    // Predicated region
    $region14: #{tpu_custom_call.1} parent=1 // pred_check
      _
    $region15: #{tpu_custom_call.1} parent=1 // pred_check_branch
      %38 = sbr.rel (0) target = $region17
    $region16: #{tpu_custom_call.1} parent=1 // pred_region
      %39 = dma.done [#allocation3], 256
    $region17: #{tpu_custom_call.1} parent=1 // pred_fallthru
      _
    // Predicated region
    $region18: #{tpu_custom_call.1} parent=1 // pred_check
      _
    $region19: #{tpu_custom_call.1} parent=1 // pred_check_branch
      %41 = sbr.rel (0) target = $region21
    $region20: #{tpu_custom_call.1} parent=1 // pred_region
      %42 = dma.done [#allocation6], 512
    $region21: #{tpu_custom_call.1} parent=1 // pred_fallthru
      _
    %v44 = vld [vmem:[#allocation2] sm:$0xf]
    %v45 = vld [vmem:[#allocation2 + $0x4] sm:$0xf]
    %v46 = vld [vmem:[#allocation2 + $0x8] sm:$0xf]
    %v47 = vld [vmem:[#allocation2 + $0xc] sm:$0xf]
    %v48 = vld [vmem:[#allocation5] sm:$0xf]
    %v49 = vld [vmem:[#allocation5 + $0x4] sm:$0xf]
    %v50 = vld [vmem:[#allocation5 + $0x8] sm:$0xf]
    %v51 = vld [vmem:[#allocation5 + $0xc] sm:$0xf]
    %v52 = vld [vmem:[#allocation5 + $0x10] sm:$0xf]
    %v53 = vld [vmem:[#allocation5 + $0x14] sm:$0xf]
    %v54 = vld [vmem:[#allocation5 + $0x18] sm:$0xf]
    %v55 = vld [vmem:[#allocation5 + $0x1c] sm:$0xf]
    %v56 = vld [vmem:[%s2] sm:$0x1]
    %v58 = vlaneseq
    %v59 = vshrl.u32 %v58, 7
    %v60 = vsub.s32 0, %v59
    %v61 = vrot.slane %v56, %v60
    %v67 = vunpack.c.l.b16 %v44
    %v68 = vunpack.c.l.b16 %v45
    %v69 = vunpack.c.l.b16 %v46
    %v70 = vunpack.c.l.b16 %v47
    %v71 = vpack.c.b16 %v68, %v67
    %v72 = vpack.c.b16 %v70, %v69
    %v81 = vunpack.c.l.b16 %v48
    %v82 = vunpack.c.l.b16 %v49
    %v83 = vunpack.c.l.b16 %v50
    %v84 = vunpack.c.l.b16 %v51
    %v85 = vunpack.c.l.b16 %v52
    %v86 = vunpack.c.l.b16 %v53
    %v87 = vunpack.c.l.b16 %v54
    %v88 = vunpack.c.l.b16 %v55
    %v89 = vpack.c.b16 %v82, %v81
    %v90 = vpack.c.b16 %v84, %v83
    %v91 = vpack.c.b16 %v86, %v85
    %v92 = vpack.c.b16 %v88, %v87
    %vm97 = vcmask 523264
    %v99 = vsel %vm97, %v71, 0
    %v102 = vsel %vm97, %v72, 0
    %104 = vmatprep.subr.bf16.mxu0 0
    %105 = vmatpush1.bf16.msra.mxu0 %v89
    %106 = vmatprep.subr.bf16.mxu0 0
    %107 = vmatpush1.bf16.msra.mxu0 %v90
    %108 = vmatprep.subr.bf16.mxu0 0
    %109 = vmatpush1.bf16.msra.mxu0 %v91
    %110 = vmatprep.subr.bf16.mxu0 0
    %111 = vmatpush1.bf16.msra.mxu0 %v92
    %112 = vmatprep.subr.bf16.mxu0 0
    %113 = vmatpush1.bf16.msra.mxu0 0
    %114 = vmatprep.subr.bf16.mxu0 0
    %115 = vmatpush1.bf16.msra.mxu0 0
    %116 = vmatprep.subr.bf16.mxu0 0
    %117 = vmatpush1.bf16.msra.mxu0 0
    %118 = vmatprep.subr.bf16.mxu0 0
    %119 = vmatpush1.bf16.msra.mxu0 0
    %120 = vmatprep.subr.bf16.mxu0 0
    %121 = vmatpush1.bf16.msra.mxu0 0
    %122 = vmatprep.subr.bf16.mxu0 0
    %123 = vmatpush1.bf16.msra.mxu0 0
    %124 = vmatprep.subr.bf16.mxu0 0
    %125 = vmatpush1.bf16.msra.mxu0 0
    %126 = vmatprep.subr.bf16.mxu0 0
    %127 = vmatpush1.bf16.msra.mxu0 0
    %128 = vmatprep.subr.bf16.mxu0 0
    %129 = vmatpush1.bf16.msra.mxu0 0
    %130 = vmatprep.subr.bf16.mxu0 0
    %131 = vmatpush1.bf16.msra.mxu0 0
    %132 = vmatprep.subr.bf16.mxu0 0
    %133 = vmatpush1.bf16.msra.mxu0 0
    %134 = vmatprep.subr.bf16.mxu0 0
    %135 = vmatpush1.bf16.msra.mxu0 0
    %136 = vmatprep.mubr.bf16.mxu0 0
    %137 = vmatmul.mubr.bf16.gmra.mrb[0].mxu0 %v99
    %v138 = vpop.f32.mrb[0].mxu0
    %v139 = vadd.f32 %v61, %v138
    %v140 = vpop.f32.mrb[0].mxu0
    %v141 = vpop.f32.mrb[0].mxu0
    %v142 = vadd.f32 %v61, %v141
    %v143 = vpop.f32.mrb[0].mxu0
    %144 = vmatprep.mubr.bf16.mxu0 0
    %145 = vmatmul.mubr.bf16.gmra.mrb[0].mxu0 %v102
    %v146 = vpop.f32.mrb[0].mxu0
    %v147 = vadd.f32 %v61, %v146
    %v148 = vpop.f32.mrb[0].mxu0
    %v149 = vpop.f32.mrb[0].mxu0
    %v150 = vadd.f32 %v61, %v149
    %v151 = vpop.f32.mrb[0].mxu0
    %152 = vdwg.mxu0
    %153 = vst [vmem:[#allocation7] sm:$0xff] %v139
    %154 = vst [vmem:[#allocation7 + $0x8] sm:$0xff] %v142
    %155 = vst [vmem:[#allocation7 + $0x10] sm:$0xff] %v147
    %156 = vst [vmem:[#allocation7 + $0x18] sm:$0xff] %v150
    // Predicated region
    $region22: #{tpu_custom_call.1} parent=1 // pred_check
      _
    $region23: #{tpu_custom_call.1} parent=1 // pred_check_branch
      %158 = sbr.rel (0) target = $region25
    $region24: #{tpu_custom_call.1} parent=1 // pred_region
      %s160 = ssub.s32 512, 512
      %161 = vsyncadd [#allocation4], %s160
      %s162 = sshll.u32 [#allocation7], 4
      %s163 = int_to_ptr.vmem [resolvable:$true] %s162
      %168 = dma.vmem_to_hbm [thread:$0]  %s163, 512, %s3, [#allocation4], 128, 128, 8
    $region25: #{tpu_custom_call.1} parent=1 // pred_fallthru
      _
    // Predicated region
    $region26: #{tpu_custom_call.1} parent=1 // pred_check
      _
    $region27: #{tpu_custom_call.1} parent=1 // pred_check_branch
      %170 = sbr.rel (0) target = $region29
    $region28: #{tpu_custom_call.1} parent=1 // pred_region
      %171 = dma.done [#allocation4], 512
    $region29: #{tpu_custom_call.1} parent=1 // pred_fallthru
      _
    %172 = vsyncpa [#allocation3], 1
    %173 = vsyncpa [#allocation6], 1
    %174 = vsyncpa [#allocation4], 1

</llo_original>
